<compile_context>
chip_gen: v5e
topology: v5e:2x2
jax: 0.10.0
libtpu: 0.0.40
codegen_flags: <defaults>
</compile_context>

<pallas_src>
import math

import jax
import jax.numpy as jnp
from jax.experimental import pallas as pl
from jax.experimental.pallas import tpu as pltpu


# ---------------------------------------------------------------------------
# Pallas kernel body: out[r, s] = x[r, s] * rnd[r, 0]
# (TR,TS) * (TR,1): lane-broadcast multiply on the VPU; DMA-bound overall.
# ---------------------------------------------------------------------------
def _gdrop_mul_kernel(x_ref, rnd_ref, o_ref):
    o_ref[...] = x_ref[...] * rnd_ref[...]


_LANE = 128
_SUBLANE_F32 = 8
_MIN_GRID_STEPS = 8                       # keep in-DMA / compute / out-DMA overlapped
_XLA_FALLBACK_BYTES = 4 * 1024 * 1024     # below this, fused XLA mul is already at roofline
_VMEM_LIMIT_BYTES = 32 * 1024 * 1024      # explicit scoped limit, safe on v5e/v6e/v7x


def _round_down(v, m):
    return max(m, (v // m) * m)


def _sublane_multiple(dtype):
    # Sub-32-bit dtypes pack rows along sublanes: 8 (f32), 16 (bf16), 32 (int8/fp8).
    itemsize = jnp.dtype(dtype).itemsize
    return _SUBLANE_F32 * max(1, 4 // max(1, itemsize))


def _default_tile_bytes():
    # Generation-aware x-tile budget.  Working set under double buffering is
    # ~4x this (+ tiny rnd buffers); keep well under the explicit vmem limit
    # and physical VMEM everywhere (v7x: 64 MiB per TC).
    try:
        vmem = pltpu.get_tpu_info().vmem_capacity_bytes
    except Exception:  # not on a TPU backend / API drift: be conservative
        vmem = 64 << 20
    return int(min(4 << 20, max(1 << 20, vmem // 16)))


def _choose_tiles(R, S, dtype, tile_bytes=None, min_steps=_MIN_GRID_STEPS):
    itemsize = jnp.dtype(dtype).itemsize
    sub = _sublane_multiple(dtype)
    if tile_bytes is None:
        tile_bytes = _default_tile_bytes()
    total = R * S * itemsize
    # Cap the per-step tile so the grid has >= min_steps steps: with <3 steps
    # BlockSpec double buffering cannot overlap input DMA, compute and
    # writeback, and on v7x one of the two TensorCores idles.
    budget = max(sub * _LANE * itemsize, min(tile_bytes, total // min_steps))
    # Lane axis: prefer the full extent whenever a single sublane-group stripe
    # fits the budget (one long contiguous DMA run per row group, unmasked
    # lane-dense vst on every block); otherwise a large multiple of 128.
    stripe = S * sub * itemsize
    if stripe <= budget:
        ts = S
    else:
        ts = _round_down(budget // (sub * itemsize), _LANE)
    # Sublane axis: full extent if it fits the budget, else a dtype-aware
    # sublane multiple (avoids half/quarter-populated vregs for bf16/int8).
    max_tr = _round_down(max(sub, budget // max(1, ts * itemsize)), sub)
    tr = R if R <= max_tr else max_tr
    return tr, ts


def _pallas_broadcast_mul(x2d, rnd2d, *, tile_rows=None, tile_lanes=None,
                          donate_input=False):
    R, S = x2d.shape
    tr_auto, ts_auto = _choose_tiles(R, S, x2d.dtype)
    tr = int(tile_rows) if tile_rows is not None else tr_auto
    ts = int(tile_lanes) if tile_lanes is not None else ts_auto

    # NOTE: the S/lane axis MUST stay innermost in the grid.  The rnd block
    # index (i, 0) is constant across the inner j loop, so the tiny (tr, 1)
    # rnd block is not re-fetched every grid step.  If the grid is ever
    # reordered, hold rnd in a per-i VMEM scratch instead.
    grid = (pl.cdiv(R, tr), pl.cdiv(S, ts))

    # Input and output BlockSpecs use IDENTICAL index maps; that is what makes
    # input_output_aliases={0: 0} (donate_input) hazard-free.  Keep them in sync.
    x_spec = pl.BlockSpec((tr, ts), lambda i, j: (i, j))
    o_spec = pl.BlockSpec((tr, ts), lambda i, j: (i, j))
    rnd_spec = pl.BlockSpec((tr, 1), lambda i, j: (i, 0))

    extra = {}
    if donate_input:
        extra["input_output_aliases"] = {0: 0}

    return pl.pallas_call(
        _gdrop_mul_kernel,
        out_shape=jax.ShapeDtypeStruct((R, S), x2d.dtype),
        grid=grid,
        in_specs=[x_spec, rnd_spec],
        out_specs=o_spec,
        compiler_params=pltpu.CompilerParams(
            # Both axes are independent -> v7x's two TensorCores split the
            # grid; neutral on single-TC v5e/v6e.
            dimension_semantics=("parallel", "parallel"),
            # Explicit scoped-VMEM limit: the ~4x double-buffered working set
            # of a 4 MiB tile overshoots v5e's 16 MiB scoped default but fits
            # 32 MiB on every generation (v7x physical VMEM is 64 MiB/TC).
            vmem_limit_bytes=_VMEM_LIMIT_BYTES,
        ),
        # Default double buffering only: deeper pipelining (pl.Buffered(3+))
        # adds VMEM pressure without hiding extra latency for symmetric
        # read/write HBM streaming.
        **extra,
    )(x2d, rnd2d)


# ---------------------------------------------------------------------------
# Random-scale generation (glue, not the hot path).  Matches the numpy
# formulas in the PyTorch module.
# ---------------------------------------------------------------------------
def _make_rnd(key, x_shape, x_dtype, *, mode, strength, axes, normalize):
    axes_list = [axes] if isinstance(axes, int) else list(axes)
    rnd_shape = tuple(s if ax in axes_list else 1 for ax, s in enumerate(x_shape))
    if mode == "drop":
        # Clamp: strength == 1.0 would give p = 0 and divide by zero.
        p = max(1.0 - float(strength), 1e-6)
        rnd = jax.random.bernoulli(key, p, rnd_shape).astype(jnp.float32) / p
    elif mode == "mul":
        rnd = (1.0 + strength) ** jax.random.normal(key, rnd_shape, jnp.float32)
    else:  # 'prop'
        coef = strength * (x_shape[1] ** 0.5)
        rnd = jax.random.normal(key, rnd_shape, jnp.float32) * coef + 1.0
    if normalize:
        rnd = rnd / jnp.linalg.norm(rnd)
    # Matches torch: rnd is cast to x's dtype BEFORE the multiply (quantizes
    # the lognormal scale for bf16 activations, as the module does).
    return rnd.astype(x_dtype)


def generalized_dropout(x, key, *, mode="mul", strength=0.4, axes=(0, 1),
                        normalize=False, deterministic=False,
                        donate_input=False, force_pallas=False,
                        tile_rows=None, tile_lanes=None):
    """JAX/Pallas port of GeneralizedDropout.forward."""
    mode = mode.lower()
    assert mode in ("mul", "drop", "prop"), "Invalid GDropLayer mode"
    if deterministic or not strength:
        return x

    rnd = _make_rnd(key, x.shape, x.dtype, mode=mode, strength=strength,
                    axes=axes, normalize=normalize)

    axes_list = [axes] if isinstance(axes, int) else list(axes)
    ndim = x.ndim
    k = len(axes_list)
    # The Pallas path handles the (default) case where the varying axes are a
    # leading prefix, e.g. axes=(0,1) on NCHW -> rnd is (B, C, 1, 1).
    is_prefix = (0 < k < ndim) and sorted(axes_list) == list(range(k))

    total_bytes = x.size * jnp.dtype(x.dtype).itemsize
    use_pallas = is_prefix and (force_pallas or total_bytes >= _XLA_FALLBACK_BYTES)

    if not use_pallas:
        # TODO(synk): non-prefix broadcast axes and small activations use the
        # fused XLA elementwise multiply (already at roofline there).
        return x * rnd

    R = math.prod(x.shape[:k])
    S = math.prod(x.shape[k:])
    x2d = x.reshape(R, S)
    rnd2d = rnd.reshape(R, 1)
    out2d = _pallas_broadcast_mul(x2d, rnd2d, tile_rows=tile_rows,
                                  tile_lanes=tile_lanes,
                                  donate_input=donate_input)
    return out2d.reshape(x.shape)


if __name__ == "__main__":
    root = jax.random.PRNGKey(0)
    kx1, kd1, kx2, kd2, kx3, kd3 = jax.random.split(root, 6)

    # --- Test 1: module-sized input (2, 4, 16, 16), force the Pallas path ---
    B, C, H, W = 2, 4, 16, 16
    x = jax.random.normal(kx1, (B, C, H, W), dtype=jnp.float32)
    out = jax.block_until_ready(generalized_dropout(x, kd1, force_pallas=True))
    rnd = _make_rnd(kd1, x.shape, x.dtype, mode="mul", strength=0.4,
                    axes=(0, 1), normalize=False)
    assert out.shape == x.shape and out.dtype == x.dtype
    assert jnp.allclose(out, x * rnd, atol=1e-6, rtol=1e-6)

    # --- Test 2: bf16 activation -> dtype-aware (16-row) sublane tiling -----
    x2 = jax.random.normal(kx2, (2, 8, 32, 32), dtype=jnp.bfloat16)
    out2 = jax.block_until_ready(generalized_dropout(x2, kd2, force_pallas=True))
    rnd2 = _make_rnd(kd2, x2.shape, x2.dtype, mode="mul", strength=0.4,
                     axes=(0, 1), normalize=False)
    assert out2.dtype == jnp.bfloat16
    assert jnp.allclose(out2.astype(jnp.float32), (x2 * rnd2).astype(jnp.float32),
                        atol=1e-2, rtol=1e-2)

    # --- Test 3: ragged shape + small forced tiles -> multi-block grid with
    #             masked edge blocks on both axes. ---------------------------
    x3 = jax.random.normal(kx3, (4, 9, 20, 20), dtype=jnp.float32)  # R=36, S=400
    out3 = jax.block_until_ready(
        generalized_dropout(x3, kd3, force_pallas=True,
                            tile_rows=16, tile_lanes=128))
    rnd3 = _make_rnd(kd3, x3.shape, x3.dtype, mode="mul", strength=0.4,
                     axes=(0, 1), normalize=False)
    assert jnp.allclose(out3, x3 * rnd3, atol=1e-6, rtol=1e-6)

    # --- Tile chooser sanity: min-grid-steps cap engages on mid-size shapes -
    tr_c, ts_c = _choose_tiles(256, 1024, jnp.float32)   # 1 MiB total
    n_steps = pl.cdiv(256, tr_c) * pl.cdiv(1024, ts_c)
    assert n_steps >= 4, (tr_c, ts_c, n_steps)

    # --- Deterministic path: identity (same return type as stochastic path) -
    assert jnp.array_equal(generalized_dropout(x, kd1, deterministic=True), x)

    print("KERNEL_OK")
</pallas_src>

<mosaic_0001>
module attributes {stable_mosaic.version = 11 : i64} {
  func.func @_gdrop_mul_kernel(%arg0: i32, %arg1: i32, %arg2: memref<8x128xf32, #tpu.memory_space<vmem>>, %arg3: memref<8x1xf32, #tpu.memory_space<vmem>>, %arg4: memref<8x128xf32, #tpu.memory_space<vmem>>) attributes {dimension_semantics = [#tpu.dimension_semantics<parallel>, #tpu.dimension_semantics<parallel>], iteration_bounds = array<i64: 1, 2>, scalar_prefetch = 0 : i64, scratch_operands = 0 : i64, tpu.core_type = #tpu.core_type<tc>, window_params = [{transform_indices = @transform_0, window_bounds = array<i64: 8, 128>}, {transform_indices = @transform_1, window_bounds = array<i64: 8, 1>}, {transform_indices = @transform_2, window_bounds = array<i64: 8, 128>}]} {
    %c0 = arith.constant 0 : index
    %c0_0 = arith.constant 0 : index
    %0 = vector.load %arg2[%c0, %c0_0] : memref<8x128xf32, #tpu.memory_space<vmem>>, vector<8x128xf32>
    %c0_1 = arith.constant 0 : index
    %c0_2 = arith.constant 0 : index
    %1 = vector.load %arg3[%c0_1, %c0_2] : memref<8x1xf32, #tpu.memory_space<vmem>>, vector<8x1xf32>
    %2 = vector.broadcast %1 : vector<8x1xf32> to vector<8x128xf32>
    %3 = arith.mulf %0, %2 : vector<8x128xf32>
    %c0_3 = arith.constant 0 : index
    %c0_4 = arith.constant 0 : index
    %4 = vector.load %arg4[%c0_3, %c0_4] : memref<8x128xf32, #tpu.memory_space<vmem>>, vector<8x128xf32>
    tpu.vector_store %arg4[%c0_3, %c0_4], %3 {strides = array<i32>} : memref<8x128xf32, #tpu.memory_space<vmem>>, vector<8x128xf32>,
    return
  }
  func.func @transform_0(%arg0: i32, %arg1: i32) -> (i32, i32) {
    %c0_i32 = arith.constant 0 : i32
    return %arg0, %arg1 : i32, i32
  }
  func.func @transform_1(%arg0: i32, %arg1: i32) -> (i32, i32) {
    %c0_i32 = arith.constant 0 : i32
    %c0_i32_0 = arith.constant 0 : i32
    return %arg0, %c0_i32 : i32, i32
  }
  func.func @transform_2(%arg0: i32, %arg1: i32) -> (i32, i32) {
    %c0_i32 = arith.constant 0 : i32
    return %arg0, %arg1 : i32, i32
  }
}

</mosaic_0001>

<llo_original>
// kernel: tpu_custom_call.1
$region0: #{tpu_custom_call.1}
  #allocation0 [shape = 'u32[]', space=smem, size = 0x4, offset = 0x4, fixed_abs, tag = 'smem constant byte address 0x4 - core index']
  #allocation1 [shape = 'u32[72,128]{1,0:T(1,128)}', space=vmem, size = 0x9000, scoped, tag = 'internal scratch']
  %s0 = inlined_call_operand.hbm [shape: f32[8,256], index: 0, kind: input, shape index: {}]
  %s1 = inlined_call_operand.vmem [shape: f32[8,1], index: 1, kind: input, shape index: {}]
  %s2 = inlined_call_operand.hbm [shape: f32[8,256], index: 2, kind: output, shape index: {}]
  %s3 = sld [smem:[#allocation0]]
  $region45: #{tpu_custom_call.1} parent=0
    _
  %s5 = ssub.s32 1, %s3
  %s6 = scalar_select 0, %s5, %s3
  $region1: #{tpu_custom_call.1} parent=0
    #allocation2 [shape = 'u8[8192]{0}', space=vmem, size = 0x2000, scoped, tag = 'input window, operand 0']
    #allocation3 [shape = 's32[2]{0}', space=sflag, size = 0x8, scoped, tag = 'scoped memory for tpu_custom_call.1']
    #allocation4 [shape = 's32[2]{0}', space=sflag, size = 0x8, scoped, tag = 'scoped memory for tpu_custom_call.1']
    #allocation5 [shape = 'u8[8192]{0}', space=vmem, size = 0x2000, scoped, tag = 'output window, operand 0']
    %7 = vsyncpa [#allocation3], 0
    %s8 = scalar_lea.sflag [#allocation3], 1
    %9 = vsyncpa %s8, 0
    %10 = vsyncpa [#allocation4], 0
    %s11 = scalar_lea.sflag [#allocation4], 1
    %12 = vsyncpa %s11, 0
    loop: start=0, step=1, limit=4
    $region2: #{tpu_custom_call.1} parent=1 // loop_pre_header
      _
    $region3: #{tpu_custom_call.1} parent=1 // loop_header
      %s14 = sphi 0, %s18
      %p15 = scmp.ge.s32.totalorder %s14, 4
      %s21 = sphi 0, %s33
      %s22 = sphi 0, %s29
      %s23 = sphi 0, %s21
      %s24 = sphi 0, %s22
      %s25 = sphi 0, %s23
      %s26 = sphi 0, %s24
      %s38 = sphi 0, %s40
      %s41 = sphi 0, %s38
      %s42 = sphi 0, %s41
      %s58 = sphi 0, %s42
      %s64 = sphi 0, %s66
      %s67 = sphi 0, %s64
      %s68 = sphi 0, %s67
      %s84 = sphi 0, %s68
      %s92 = sphi 0, %s94
      %s95 = sphi 0, %s92
      %s96 = sphi 0, %s95
      %s112 = sphi 0, %s96
    $region4: #{tpu_custom_call.1} parent=1 // loop_header_branch
      %17 = sbr.rel (%p15) target = $region8
    $region5: #{tpu_custom_call.1} parent=1 // loop_body
      %s19 = ssub.s32 %s14, 1
      %s20 = ssub.s32 %s14, 2
      %s27 = sadd.s32 1, %s22
      %p28 = scmp.ge.s32.totalorder %s27, 2
      %s29 = scalar_select %p28, 0, %s27
      %s30 = sadd.s32 1, %s21
      %s31 = scalar_select %p28, %s30, %s21
      %p32 = scmp.ge.s32.totalorder %s31, 1
      %s33 = scalar_select %p32, 0, %s31
      %s34 = ssub.s32 %s21, %s33
      %s35 = ssub.s32 %s22, %s29
      %s36 = sor.u32 %s34, %s35
      %p37 = scmp.eq.s32.totalorder %s36, 0
      %s39 = sadd.s32 %s38, 1
      %s40 = scalar_select %p37, %s38, %s39
      %p43 = pneg %p37
      %p44 = scmp.eq.s32.totalorder %s14, 1
      %p45 = por %p43, %p44
      %p46 = scmp.ne.s32.totalorder %s38, %s41
      %p47 = scmp.eq.s32.totalorder %s14, 0
      %p48 = por %p46, %p47
      %p49 = scmp.ne.s32.totalorder %s38, %s41
      %p50 = scmp.eq.s32.totalorder %s19, 1
      %p51 = por %p49, %p50
      %p52 = scmp.ne.s32.totalorder %s41, %s42
      %p53 = scmp.eq.s32.totalorder %s19, 0
      %p54 = por %p52, %p53
      %p55 = scmp.ne.s32.totalorder %s41, %s42
      %p56 = scmp.eq.s32.totalorder %s20, 1
      %p57 = por %p55, %p56
      %p59 = scmp.ne.s32.totalorder %s42, %s58
      %p60 = scmp.eq.s32.totalorder %s20, 0
      %p61 = por %p59, %p60
      %s62 = ssub.s32 %s21, %s33
      %p63 = scmp.eq.s32.totalorder %s62, 0
      %s65 = sadd.s32 %s64, 1
      %s66 = scalar_select %p63, %s64, %s65
      %p69 = pneg %p63
      %p70 = scmp.eq.s32.totalorder %s14, 1
      %p71 = por %p69, %p70
      %p72 = scmp.ne.s32.totalorder %s64, %s67
      %p73 = scmp.eq.s32.totalorder %s14, 0
      %p74 = por %p72, %p73
      %p75 = scmp.ne.s32.totalorder %s64, %s67
      %p76 = scmp.eq.s32.totalorder %s19, 1
      %p77 = por %p75, %p76
      %p78 = scmp.ne.s32.totalorder %s67, %s68
      %p79 = scmp.eq.s32.totalorder %s19, 0
      %p80 = por %p78, %p79
      %p81 = scmp.ne.s32.totalorder %s67, %s68
      %p82 = scmp.eq.s32.totalorder %s20, 1
      %p83 = por %p81, %p82
      %p85 = scmp.ne.s32.totalorder %s68, %s84
      %p86 = scmp.eq.s32.totalorder %s20, 0
      %p87 = por %p85, %p86
      %s88 = ssub.s32 %s21, %s33
      %s89 = ssub.s32 %s22, %s29
      %s90 = sor.u32 %s88, %s89
      %p91 = scmp.eq.s32.totalorder %s90, 0
      %s93 = sadd.s32 %s92, 1
      %s94 = scalar_select %p91, %s92, %s93
      %p97 = pneg %p91
      %p98 = scmp.eq.s32.totalorder %s14, 1
      %p99 = por %p97, %p98
      %p100 = scmp.ne.s32.totalorder %s92, %s95
      %p101 = scmp.eq.s32.totalorder %s14, 0
      %p102 = por %p100, %p101
      %p103 = scmp.ne.s32.totalorder %s92, %s95
      %p104 = scmp.eq.s32.totalorder %s19, 1
      %p105 = por %p103, %p104
      %p106 = scmp.ne.s32.totalorder %s95, %s96
      %p107 = scmp.eq.s32.totalorder %s19, 0
      %p108 = por %p106, %p107
      %p109 = scmp.ne.s32.totalorder %s95, %s96
      %p110 = scmp.eq.s32.totalorder %s20, 1
      %p111 = por %p109, %p110
      %p113 = scmp.ne.s32.totalorder %s96, %s112
      %p114 = scmp.eq.s32.totalorder %s20, 0
      %p115 = por %p113, %p114
      %p116 = scmp.le.s32.totalorder 1, %s14
      %p117 = scmp.lt.s32.totalorder %s14, 3
      %p118 = pnand %p116, %p117
      %p119 = pneg %p118
      // Predicated region
      $region9: #{tpu_custom_call.1} parent=5 // pred_check
        _
      $region10: #{tpu_custom_call.1} parent=5 // pred_check_branch
        %121 = sbr.rel (%p118) target = $region12
      $region11: #{tpu_custom_call.1} parent=5 // pred_region
        %s122 = ssub.s32 %s14, 1
        // Predicated region
        $region13: #{tpu_custom_call.1} parent=11 // pred_check
          %p123 = pneg %p80
        $region14: #{tpu_custom_call.1} parent=11 // pred_check_branch
          %125 = sbr.rel (%p123) target = $region16
        $region15: #{tpu_custom_call.1} parent=11 // pred_region
          %p126 = scmp.lt.s32.totalorder %s23, 0
          %s127 = scalar_select %p126, %s23, 0
          %s128 = smul.addr %s127, 8
          %s129 = scalar_lea.vmem %s1, %s128
        $region16: #{tpu_custom_call.1} parent=11 // pred_fallthru
          _
      $region12: #{tpu_custom_call.1} parent=5 // pred_fallthru
        _
      %p130 = scmp.lt.s32.totalorder %s14, 2
      // Predicated region
      $region17: #{tpu_custom_call.1} parent=5 // pred_check
        %p131 = pneg %p130
      $region18: #{tpu_custom_call.1} parent=5 // pred_check_branch
        %133 = sbr.rel (%p131) target = $region20
      $region19: #{tpu_custom_call.1} parent=5 // pred_region
        // Predicated region
        $region21: #{tpu_custom_call.1} parent=19 // pred_check
          %p134 = pneg %p48
        $region22: #{tpu_custom_call.1} parent=19 // pred_check_branch
          %136 = sbr.rel (%p134) target = $region24
        $region23: #{tpu_custom_call.1} parent=19 // pred_region
          %s137 = sand.u32 %s38, 1
          %s138 = scalar_lea.sflag [#allocation3], %s137
          %s139 = sand.u32 %s38, 1
          %s140 = smul.addr %s139, 8
          %s141 = scalar_lea.vmem [#allocation2], %s140
          %143 = vsyncadd %s138, 0
          %s144 = smul.addr %s21, 2
          %s145 = sadd.s32 %s22, %s144
          %s146 = smul.addr %s145, 8
          %s147 = scalar_lea.hbm %s0, %s146
          %s149 = sshll.u32 %s147, 4
          %s150 = int_to_ptr.hbm [resolvable:$true] %s149
          %s151 = sshll.u32 %s141, 4
          %s152 = int_to_ptr.vmem [resolvable:$true] %s151
          %154 = dma.hbm_to_vmem [thread:$0]  %s150, 128, %s152, %s138
        $region24: #{tpu_custom_call.1} parent=19 // pred_fallthru
          _
      $region20: #{tpu_custom_call.1} parent=5 // pred_fallthru
        _
      %p155 = scmp.le.s32.totalorder 1, %s14
      %p156 = scmp.lt.s32.totalorder %s14, 3
      %p157 = pnand %p155, %p156
      %p158 = pneg %p157
      // Predicated region
      $region25: #{tpu_custom_call.1} parent=5 // pred_check
        _
      $region26: #{tpu_custom_call.1} parent=5 // pred_check_branch
        %160 = sbr.rel (%p157) target = $region28
      $region27: #{tpu_custom_call.1} parent=5 // pred_region
        %s161 = ssub.s32 %s14, 1
        %s162 = sand.u32 %s41, 1
        %s163 = scalar_lea.sflag [#allocation3], %s162
        %s164 = sand.u32 %s41, 1
        %s165 = smul.addr %s164, 8
        %s166 = scalar_lea.vmem [#allocation2], %s165
        // Predicated region
        $region29: #{tpu_custom_call.1} parent=27 // pred_check
          %p167 = pneg %p54
        $region30: #{tpu_custom_call.1} parent=27 // pred_check_branch
          %169 = sbr.rel (%p167) target = $region32
        $region31: #{tpu_custom_call.1} parent=27 // pred_region
          %171 = dma.done %s163, 128
        $region32: #{tpu_custom_call.1} parent=27 // pred_fallthru
          _
        %s172 = sand.u32 %s41, 1
        %s173 = scalar_lea.sflag [#allocation3], %s172
        %s174 = sand.u32 %s41, 1
        %s175 = smul.addr %s174, 8
        %s176 = scalar_lea.vmem [#allocation2], %s175
        %p177 = pneg %p54
        %p178 = pneg %p51
        %p179 = scmp.lt.s32.totalorder %s23, 0
        %s180 = scalar_select %p179, %s23, 0
        %s181 = smul.addr %s180, 8
        %s182 = scalar_lea.vmem %s1, %s181
        %p183 = pneg %p80
        %p184 = pneg %p77
        %p185 = pneg %p108
        %p186 = pneg %p105
        %s187 = sand.u32 %s95, 1
        %s188 = scalar_lea.sflag [#allocation4], %s187
        %s189 = sand.u32 %s95, 1
        %s190 = smul.addr %s189, 8
        %s191 = scalar_lea.vmem [#allocation5], %s190
        %p192 = scmp.lt.s32.totalorder %s23, 0
        %s193 = scalar_select %p192, %s23, 0
        %s194 = smul.addr %s193, 8
        %s195 = scalar_lea.vmem %s1, %s194
        %v196 = vld [vmem:[%s166] sm:$0xff]
        %v197 = vld [vmem:[%s195] sm:$0xff]
        %199 = vset.pattern.permute.xlu0 0
        %200 = vperm.xlu0 %199, %v197
        %v201 = vpop.permute.xlu0 %200
        %v203 = vmul.f32 %v196, %v201
        %204 = vst [vmem:[%s191] sm:$0xff] %v203
        %s205 = sand.u32 %s95, 1
        %s206 = scalar_lea.sflag [#allocation4], %s205
        %s207 = sand.u32 %s95, 1
        %s208 = smul.addr %s207, 8
        %s209 = scalar_lea.vmem [#allocation5], %s208
        // Predicated region
        $region33: #{tpu_custom_call.1} parent=27 // pred_check
          %p210 = pneg %p105
        $region34: #{tpu_custom_call.1} parent=27 // pred_check_branch
          %212 = sbr.rel (%p210) target = $region36
        $region35: #{tpu_custom_call.1} parent=27 // pred_region
          %214 = vsyncadd %s206, 0
          %s215 = smul.addr %s23, 2
          %s216 = sadd.s32 %s24, %s215
          %s217 = smul.addr %s216, 8
          %s218 = scalar_lea.hbm %s2, %s217
          %s220 = sshll.u32 %s209, 4
          %s221 = int_to_ptr.vmem [resolvable:$true] %s220
          %s222 = sshll.u32 %s218, 4
          %s223 = int_to_ptr.hbm [resolvable:$true] %s222
          %225 = dma.vmem_to_hbm [thread:$0]  %s221, 128, %s223, %s206
        $region36: #{tpu_custom_call.1} parent=27 // pred_fallthru
          _
      $region28: #{tpu_custom_call.1} parent=5 // pred_fallthru
        _
      %p226 = scmp.le.s32.totalorder 2, %s14
      // Predicated region
      $region37: #{tpu_custom_call.1} parent=5 // pred_check
        %p227 = pneg %p226
      $region38: #{tpu_custom_call.1} parent=5 // pred_check_branch
        %229 = sbr.rel (%p227) target = $region40
      $region39: #{tpu_custom_call.1} parent=5 // pred_region
        %s230 = ssub.s32 %s14, 2
        // Predicated region
        $region41: #{tpu_custom_call.1} parent=39 // pred_check
          %p231 = pneg %p111
        $region42: #{tpu_custom_call.1} parent=39 // pred_check_branch
          %233 = sbr.rel (%p231) target = $region44
        $region43: #{tpu_custom_call.1} parent=39 // pred_region
          %s234 = sand.u32 %s96, 1
          %s235 = scalar_lea.sflag [#allocation4], %s234
          %s236 = sand.u32 %s96, 1
          %s237 = smul.addr %s236, 8
          %s238 = scalar_lea.vmem [#allocation5], %s237
          %240 = dma.done %s235, 128
        $region44: #{tpu_custom_call.1} parent=39 // pred_fallthru
          _
      $region40: #{tpu_custom_call.1} parent=5 // pred_fallthru
        _
    $region6: #{tpu_custom_call.1} parent=1 // loop_footer
      %s18 = sadd.s32 1, %s14
    $region7: #{tpu_custom_call.1} parent=1 // loop_footer_branch
      %13 = sbr.rel target = $region3
    $region8: #{tpu_custom_call.1} parent=1 // loop_exit
      _
    %241 = vsyncpa [#allocation3], 1
    %s242 = scalar_lea.sflag [#allocation3], 1
    %243 = vsyncpa %s242, 1
    %244 = vsyncpa [#allocation4], 1
    %s245 = scalar_lea.sflag [#allocation4], 1
    %246 = vsyncpa %s245, 1

</llo_original>
